<compile_context>
chip_gen: v7x
topology: tpu7x:2x2x1
jax: 0.10.0
libtpu: 0.0.40
codegen_flags: <defaults>
</compile_context>

<pallas_src>
import jax
import jax.numpy as jnp
from jax import lax
from jax.experimental import pallas as pl
from jax.experimental.pallas import tpu as pltpu


def _lrelu(x, slope=0.2):
    return jnp.where(x > 0, x, slope * x)


def _pick_bt(B):
    """Largest batch-tile that still leaves >=2 grid steps (v7x megacore)."""
    if B <= 1:
        return 1
    for bt in range(B // 2, 0, -1):
        if B % bt == 0:
            return bt
    return 1


# ----------------------------------------------------------------------------
# Hoisted z-only path: mapping MLP + Wstyle_w term + bias + 1  (batched XLA)
# ----------------------------------------------------------------------------
def _mapping_and_style(z, params):
    z = z.astype(jnp.float32)
    h = _lrelu(z @ params["w1"] + params["b1"])
    wlat = _lrelu(h @ params["w2"] + params["b2"])
    return wlat @ params["wstyle_w"] + params["bstyle"] + 1.0          # (B, F)


# ----------------------------------------------------------------------------
# Fused kernel: mask -> encoder -> pooled co-modulation -> folded synthesis
# ----------------------------------------------------------------------------
def comod_fused(image_nchw, mask_nchw, style_base, params, *, bt=None):
    B, C, H, W = image_nchw.shape
    HW = H * W
    F = params["wstyle_g"].shape[0]
    Cout = params["wsyn_fc"].shape[1]
    io_dtype = image_nchw.dtype

    if bt is None:
        bt = _pick_bt(B)
    assert B % bt == 0, "batch must be divisible by the batch tile"

    # Channels-first layout: NCHW -> (B, C, HW) is a free (contiguous) reshape.
    img_flat = image_nchw.reshape(B, C, HW)
    mask_flat = mask_nchw.reshape(B, 1, HW)
    sbase = style_base.reshape(B, F, 1).astype(jnp.float32)            # column form

    def kernel(img_ref, mask_ref, sbase_ref, enc_ref, wg_ref, wsyn_ref, bsyn_ref,
               fake_ref, inp_ref):
        enc = enc_ref[...]                         # (F, C+2) f32, packed params
        wimg = enc[:, :C]                          # (F, C)
        wmask = enc[:, C:C + 1]                    # (F, 1)
        benc = enc[:, C + 1:C + 2]                 # (F, 1)
        wg = wg_ref[...]                           # (F, F)
        wsyn = wsyn_ref[...]                       # (F, Cout)  pre-transposed
        bsyn = bsyn_ref[...]                       # (Cout, 1)

        for b in range(bt):                        # static unroll over batch tile
            # masked input:  inp = image * (1 - mask)          (C, HW), f32 math
            img = img_ref[b].astype(jnp.float32)   # (C, HW)  HW on lanes
            m = mask_ref[b].astype(jnp.float32)    # (1, HW)
            inp = img * (1.0 - m)
            inp_ref[b] = inp.astype(inp_ref.dtype)             # lane-dense store

            # encoder 1x1 conv (channels-first matmul) + mask fold + lrelu
            feat = jnp.dot(wimg, inp, preferred_element_type=jnp.float32)  # (F, HW)
            feat = _lrelu(feat + wmask * m + benc)

            # global average pool (f32) + co-modulation style (column form)
            pooled = jnp.mean(feat, axis=1, keepdims=True)                 # (F, 1)
            s = sbase_ref[b] + jnp.dot(wg, pooled,
                                       preferred_element_type=jnp.float32)  # (F, 1)

            # style folded into the synthesis weight: y = (Wsyn^T ⊙ s)ᵀ @ feat
            wmod = wsyn * s                                                # (F, Cout)
            y = lax.dot_general(wmod, feat, (((0,), (0,)), ((), ())),
                                preferred_element_type=jnp.float32) + bsyn  # (Cout, HW)
            fake_ref[b] = jnp.tanh(y).astype(fake_ref.dtype)

    fake_flat, inp_flat = pl.pallas_call(
        kernel,
        out_shape=(jax.ShapeDtypeStruct((B, Cout, HW), io_dtype),
                   jax.ShapeDtypeStruct((B, C, HW), io_dtype)),
        grid=(B // bt,),
        in_specs=[
            pl.BlockSpec((bt, C, HW), lambda i: (i, 0, 0)),
            pl.BlockSpec((bt, 1, HW), lambda i: (i, 0, 0)),
            pl.BlockSpec((bt, F, 1), lambda i: (i, 0, 0)),
            pl.BlockSpec((F, C + 2), lambda i: (0, 0)),
            pl.BlockSpec((F, F), lambda i: (0, 0)),
            pl.BlockSpec((F, Cout), lambda i: (0, 0)),
            pl.BlockSpec((Cout, 1), lambda i: (0, 0)),
        ],
        out_specs=(pl.BlockSpec((bt, Cout, HW), lambda i: (i, 0, 0)),
                   pl.BlockSpec((bt, C, HW), lambda i: (i, 0, 0))),
        compiler_params=pltpu.CompilerParams(
            dimension_semantics=("parallel",)),
    )(img_flat, mask_flat, sbase,
      params["enc_pack"], params["wstyle_g"], params["wsyn_fc"], params["bsyn_c"])

    fake_nchw = fake_flat.reshape(B, Cout, H, W)
    inp_nchw = inp_flat.reshape(B, C, H, W)
    return fake_nchw, inp_nchw


# ----------------------------------------------------------------------------
# Model glue: CoModModel.forward(data, mode='inference')
# ----------------------------------------------------------------------------
def init_params(key, z_dim=32, feat_dim=32, c_img=3, c_out=3):
    ks = jax.random.split(key, 7)
    inv = lambda n: 1.0 / jnp.sqrt(jnp.float32(n))
    f32 = jnp.float32
    wimg = jax.random.normal(ks[2], (feat_dim, c_img), f32) * inv(c_img + 1)
    wmask = jax.random.normal(ks[3], (feat_dim, 1), f32) * inv(c_img + 1)
    benc = jnp.zeros((feat_dim, 1), f32)
    return {
        # mapping MLP (row form: h = z @ W + b), hoisted out of the kernel
        "w1": jax.random.normal(ks[0], (z_dim, z_dim), f32) * inv(z_dim),
        "b1": jnp.zeros((z_dim,), f32),
        "w2": jax.random.normal(ks[1], (z_dim, z_dim), f32) * inv(z_dim),
        "b2": jnp.zeros((z_dim,), f32),
        # co-modulation style affine: w-part hoisted, pooled-part in-kernel
        "wstyle_w": jax.random.normal(ks[4], (z_dim, feat_dim), f32) * inv(z_dim + feat_dim),
        "bstyle": jnp.zeros((feat_dim,), f32),
        "wstyle_g": jax.random.normal(ks[5], (feat_dim, feat_dim), f32) * inv(z_dim + feat_dim),
        # encoder 1x1 conv packed [Wimg | wmask | benc] -> one (F, C+2) operand
        "enc_pack": jnp.concatenate([wimg, wmask, benc], axis=1),
        # synthesis toRGB, stored pre-transposed (F, Cout) for the style fold
        "wsyn_fc": jax.random.normal(ks[6], (feat_dim, c_out), f32) * inv(feat_dim),
        "bsyn_c": jnp.zeros((c_out, 1), f32),
    }


@jax.jit
def comod_inference(image_nchw, mask_nchw, z, params):
    """Equivalent of CoModModel.forward(data, mode='inference'):
    returns (fake_image, real_image * (1 - mask)), both NCHW."""
    style_base = _mapping_and_style(z, params)            # batched XLA matmuls
    return comod_fused(image_nchw, mask_nchw, style_base, params)


# ----------------------------------------------------------------------------
# Pure-JAX reference (same math, un-fused) for correctness checking
# ----------------------------------------------------------------------------
def comod_reference(image, mask, z, params):
    B, C, H, W = image.shape
    x = image.astype(jnp.float32)
    m = mask.astype(jnp.float32)
    inp = x * (1.0 - m)
    sbase = _mapping_and_style(z, params)                               # (B, F)
    enc = params["enc_pack"]
    F = enc.shape[0]
    wimg, wmask, benc = enc[:, :C], enc[:, C], enc[:, C + 1]
    inp_f = inp.reshape(B, C, H * W)
    m_f = m.reshape(B, 1, H * W)
    feat = (jnp.einsum('fc,bch->bfh', wimg, inp_f)
            + wmask[None, :, None] * m_f + benc[None, :, None])
    feat = _lrelu(feat)
    pooled = feat.mean(axis=2)                                          # (B, F)
    s = sbase + pooled @ params["wstyle_g"].T                           # (B, F)
    y = (jnp.einsum('fo,bf,bfh->boh', params["wsyn_fc"], s, feat)
         + params["bsyn_c"].reshape(1, -1, 1))
    fake = jnp.tanh(y).reshape(B, -1, H, W)
    return fake, inp


if __name__ == "__main__":
    key = jax.random.PRNGKey(0)
    k_img, k_mask, k_z, k_par = jax.random.split(key, 4)

    B, C, H, W = 2, 3, 16, 16
    Z, FEAT = 32, 32

    # bf16 I/O for the bandwidth-dominant tensors; compute stays f32 in-kernel.
    image = jax.random.uniform(k_img, (B, C, H, W), jnp.float32,
                               minval=-1.0, maxval=1.0).astype(jnp.bfloat16)
    mask = (jax.random.uniform(k_mask, (B, 1, H, W), jnp.float32) > 0.5
            ).astype(jnp.bfloat16)                                      # {0, 1}
    z = jax.random.normal(k_z, (B, Z), jnp.float32)
    params = init_params(k_par, z_dim=Z, feat_dim=FEAT, c_img=C, c_out=C)

    fake, inp = comod_inference(image, mask, z, params)
    jax.block_until_ready((fake, inp))

    fake_ref, inp_ref = comod_reference(image, mask, z, params)

    assert fake.shape == (B, C, H, W) and inp.shape == (B, C, H, W)
    assert bool(jnp.all(jnp.isfinite(fake.astype(jnp.float32))))
    assert bool(jnp.all(jnp.isfinite(inp.astype(jnp.float32))))
    # inp semantics: image * (1 - mask)  (exact even in bf16 since mask is 0/1)
    assert bool(jnp.allclose(inp.astype(jnp.float32),
                             (image * (1.0 - mask)).astype(jnp.float32), atol=1e-6))
    assert bool(jnp.allclose(inp.astype(jnp.float32), inp_ref, atol=1e-6))
    # fake vs reference (bf16 output rounding + fold-order tolerance)
    assert bool(jnp.allclose(fake.astype(jnp.float32), fake_ref, atol=2e-2))
    print("KERNEL_OK")
</pallas_src>

<mosaic_0001>
module attributes {stable_mosaic.version = 11 : i64} {
  func.func @kernel(%arg0: i32, %arg1: memref<1x3x256xbf16, #tpu.memory_space<vmem>>, %arg2: memref<1x1x256xbf16, #tpu.memory_space<vmem>>, %arg3: memref<1x32x1xf32, #tpu.memory_space<vmem>>, %arg4: memref<32x5xf32, #tpu.memory_space<vmem>>, %arg5: memref<32x32xf32, #tpu.memory_space<vmem>>, %arg6: memref<32x3xf32, #tpu.memory_space<vmem>>, %arg7: memref<3x1xf32, #tpu.memory_space<vmem>>, %arg8: memref<1x3x256xbf16, #tpu.memory_space<vmem>>, %arg9: memref<1x3x256xbf16, #tpu.memory_space<vmem>>) attributes {dimension_semantics = [#tpu.dimension_semantics<parallel>], iteration_bounds = array<i64: 2>, scalar_prefetch = 0 : i64, scratch_operands = 0 : i64, tpu.core_type = #tpu.core_type<tc>, window_params = [{transform_indices = @transform_0, window_bounds = array<i64: 1, 3, 256>}, {transform_indices = @transform_1, window_bounds = array<i64: 1, 1, 256>}, {transform_indices = @transform_2, window_bounds = array<i64: 1, 32, 1>}, {pipeline_mode = #tpu.pipeline_mode<synchronous>, transform_indices = @transform_3, window_bounds = array<i64: 32, 5>}, {pipeline_mode = #tpu.pipeline_mode<synchronous>, transform_indices = @transform_4, window_bounds = array<i64: 32, 32>}, {pipeline_mode = #tpu.pipeline_mode<synchronous>, transform_indices = @transform_5, window_bounds = array<i64: 32, 3>}, {pipeline_mode = #tpu.pipeline_mode<synchronous>, transform_indices = @transform_6, window_bounds = array<i64: 3, 1>}, {transform_indices = @transform_7, window_bounds = array<i64: 1, 3, 256>}, {transform_indices = @transform_8, window_bounds = array<i64: 1, 3, 256>}]} {
    %c0 = arith.constant 0 : index
    %c0_0 = arith.constant 0 : index
    %0 = vector.load %arg4[%c0, %c0_0] : memref<32x5xf32, #tpu.memory_space<vmem>>, vector<32x5xf32>
    %1 = vector.extract_strided_slice %0 {offsets = [0, 0], sizes = [32, 3], strides = [1, 1]} : vector<32x5xf32> to vector<32x3xf32>
    %2 = vector.extract_strided_slice %0 {offsets = [0, 3], sizes = [32, 1], strides = [1, 1]} : vector<32x5xf32> to vector<32x1xf32>
    %3 = vector.extract_strided_slice %0 {offsets = [0, 4], sizes = [32, 1], strides = [1, 1]} : vector<32x5xf32> to vector<32x1xf32>
    %c0_1 = arith.constant 0 : index
    %c0_2 = arith.constant 0 : index
    %4 = vector.load %arg5[%c0_1, %c0_2] : memref<32x32xf32, #tpu.memory_space<vmem>>, vector<32x32xf32>
    %c0_3 = arith.constant 0 : index
    %c0_4 = arith.constant 0 : index
    %5 = vector.load %arg6[%c0_3, %c0_4] : memref<32x3xf32, #tpu.memory_space<vmem>>, vector<32x3xf32>
    %c0_5 = arith.constant 0 : index
    %c0_6 = arith.constant 0 : index
    %6 = vector.load %arg7[%c0_5, %c0_6] : memref<3x1xf32, #tpu.memory_space<vmem>>, vector<3x1xf32>
    %c0_7 = arith.constant 0 : index
    %c0_8 = arith.constant 0 : index
    %c0_9 = arith.constant 0 : index
    %7 = vector.load %arg1[%c0_7, %c0_8, %c0_9] : memref<1x3x256xbf16, #tpu.memory_space<vmem>>, vector<1x3x256xbf16>
    %8 = vector.shape_cast %7 : vector<1x3x256xbf16> to vector<3x256xbf16>
    %9 = arith.extf %8 : vector<3x256xbf16> to vector<3x256xf32>
    %c0_10 = arith.constant 0 : index
    %c0_11 = arith.constant 0 : index
    %c0_12 = arith.constant 0 : index
    %10 = vector.load %arg2[%c0_10, %c0_11, %c0_12] : memref<1x1x256xbf16, #tpu.memory_space<vmem>>, vector<1x1x256xbf16>
    %11 = vector.shape_cast %10 : vector<1x1x256xbf16> to vector<1x256xbf16>
    %12 = arith.extf %11 : vector<1x256xbf16> to vector<1x256xf32>
    %cst = arith.constant 1.000000e+00 : f32
    %13 = vector.broadcast %cst : f32 to vector<1x256xf32>
    %14 = arith.subf %13, %12 : vector<1x256xf32>
    %15 = vector.broadcast %14 : vector<1x256xf32> to vector<3x256xf32>
    %16 = arith.mulf %9, %15 : vector<3x256xf32>
    %17 = arith.truncf %16 : vector<3x256xf32> to vector<3x256xbf16>
    %c0_13 = arith.constant 0 : index
    %c0_14 = arith.constant 0 : index
    %c0_15 = arith.constant 0 : index
    %18 = vector.load %arg9[%c0_13, %c0_14, %c0_15] : memref<1x3x256xbf16, #tpu.memory_space<vmem>>, vector<1x3x256xbf16>
    %19 = vector.shape_cast %18 : vector<1x3x256xbf16> to vector<3x256xbf16>
    %20 = vector.shape_cast %17 : vector<3x256xbf16> to vector<1x3x256xbf16>
    tpu.vector_store %arg9[%c0_13, %c0_14, %c0_15], %20 {strides = array<i32>} : memref<1x3x256xbf16, #tpu.memory_space<vmem>>, vector<1x3x256xbf16>,
    %cst_16 = arith.constant dense<0.000000e+00> : vector<32x256xf32>
    %21 = tpu.matmul %1, %16, %cst_16 {dimension_numbers = #tpu.dot_dimension_numbers<[1], [0], [0], [1], [0, 0, 1, 1], [], []>} : vector<32x3xf32>, vector<3x256xf32>, vector<32x256xf32> -> vector<32x256xf32>
    %22 = vector.broadcast %2 : vector<32x1xf32> to vector<32x256xf32>
    %23 = vector.broadcast %12 : vector<1x256xf32> to vector<32x256xf32>
    %24 = arith.mulf %22, %23 : vector<32x256xf32>
    %25 = arith.addf %21, %24 : vector<32x256xf32>
    %26 = vector.broadcast %3 : vector<32x1xf32> to vector<32x256xf32>
    %27 = arith.addf %25, %26 : vector<32x256xf32>
    %cst_17 = arith.constant 0.000000e+00 : f32
    %28 = vector.broadcast %cst_17 : f32 to vector<32x256xf32>
    %29 = arith.cmpf ogt, %27, %28 : vector<32x256xf32>
    %cst_18 = arith.constant 2.000000e-01 : f32
    %30 = vector.broadcast %cst_18 : f32 to vector<32x256xf32>
    %31 = arith.mulf %30, %27 : vector<32x256xf32>
    %32 = arith.select %29, %27, %31 : vector<32x256xi1>, vector<32x256xf32>
    %cst_19 = arith.constant dense<0.000000e+00> : vector<32xf32>
    %33 = vector.multi_reduction <add>, %32, %cst_19 [1] : vector<32x256xf32> to vector<32xf32>
    %34 = vector.shape_cast %33 : vector<32xf32> to vector<32x1xf32>
    %cst_20 = arith.constant 2.560000e+02 : f32
    %35 = vector.broadcast %cst_20 : f32 to vector<32x1xf32>
    %36 = arith.divf %34, %35 : vector<32x1xf32>
    %c0_21 = arith.constant 0 : index
    %c0_22 = arith.constant 0 : index
    %c0_23 = arith.constant 0 : index
    %37 = vector.load %arg3[%c0_21, %c0_22, %c0_23] : memref<1x32x1xf32, #tpu.memory_space<vmem>>, vector<1x32x1xf32>
    %38 = vector.shape_cast %37 : vector<1x32x1xf32> to vector<32x1xf32>
    %cst_24 = arith.constant dense<0.000000e+00> : vector<32x1xf32>
    %39 = tpu.matmul %4, %36, %cst_24 {dimension_numbers = #tpu.dot_dimension_numbers<[1], [0], [0], [1], [0, 0, 1, 1], [], []>} : vector<32x32xf32>, vector<32x1xf32>, vector<32x1xf32> -> vector<32x1xf32>
    %40 = arith.addf %38, %39 : vector<32x1xf32>
    %41 = vector.broadcast %40 : vector<32x1xf32> to vector<32x3xf32>
    %42 = arith.mulf %5, %41 : vector<32x3xf32>
    %cst_25 = arith.constant dense<0.000000e+00> : vector<3x256xf32>
    %43 = tpu.matmul %42, %32, %cst_25 {dimension_numbers = #tpu.dot_dimension_numbers<[0], [0], [1], [1], [0, 1, 1, 1], [], []>} : vector<32x3xf32>, vector<32x256xf32>, vector<3x256xf32> -> vector<3x256xf32>
    %44 = vector.broadcast %6 : vector<3x1xf32> to vector<3x256xf32>
    %45 = arith.addf %43, %44 : vector<3x256xf32>
    %46 = math.tanh %45 : vector<3x256xf32>
    %47 = arith.truncf %46 : vector<3x256xf32> to vector<3x256xbf16>
    %c0_26 = arith.constant 0 : index
    %c0_27 = arith.constant 0 : index
    %c0_28 = arith.constant 0 : index
    %48 = vector.load %arg8[%c0_26, %c0_27, %c0_28] : memref<1x3x256xbf16, #tpu.memory_space<vmem>>, vector<1x3x256xbf16>
    %49 = vector.shape_cast %48 : vector<1x3x256xbf16> to vector<3x256xbf16>
    %50 = vector.shape_cast %47 : vector<3x256xbf16> to vector<1x3x256xbf16>
    tpu.vector_store %arg8[%c0_26, %c0_27, %c0_28], %50 {strides = array<i32>} : memref<1x3x256xbf16, #tpu.memory_space<vmem>>, vector<1x3x256xbf16>,
    return
  }
  func.func @transform_0(%arg0: i32) -> (i32, i32, i32) {
    %c0_i32 = arith.constant 0 : i32
    %c0_i32_0 = arith.constant 0 : i32
    %c0_i32_1 = arith.constant 0 : i32
    return %arg0, %c0_i32, %c0_i32_0 : i32, i32, i32
  }
  func.func @transform_1(%arg0: i32) -> (i32, i32, i32) {
    %c0_i32 = arith.constant 0 : i32
    %c0_i32_0 = arith.constant 0 : i32
    %c0_i32_1 = arith.constant 0 : i32
    return %arg0, %c0_i32, %c0_i32_0 : i32, i32, i32
  }
  func.func @transform_2(%arg0: i32) -> (i32, i32, i32) {
    %c0_i32 = arith.constant 0 : i32
    %c0_i32_0 = arith.constant 0 : i32
    %c0_i32_1 = arith.constant 0 : i32
    return %arg0, %c0_i32, %c0_i32_0 : i32, i32, i32
  }
  func.func @transform_3(%arg0: i32) -> (i32, i32) {
    %c0_i32 = arith.constant 0 : i32
    %c0_i32_0 = arith.constant 0 : i32
    %c0_i32_1 = arith.constant 0 : i32
    return %c0_i32, %c0_i32_0 : i32, i32
  }
  func.func @transform_4(%arg0: i32) -> (i32, i32) {
    %c0_i32 = arith.constant 0 : i32
    %c0_i32_0 = arith.constant 0 : i32
    %c0_i32_1 = arith.constant 0 : i32
    return %c0_i32, %c0_i32_0 : i32, i32
  }
  func.func @transform_5(%arg0: i32) -> (i32, i32) {
    %c0_i32 = arith.constant 0 : i32
    %c0_i32_0 = arith.constant 0 : i32
    %c0_i32_1 = arith.constant 0 : i32
    return %c0_i32, %c0_i32_0 : i32, i32
  }
  func.func @transform_6(%arg0: i32) -> (i32, i32) {
    %c0_i32 = arith.constant 0 : i32
    %c0_i32_0 = arith.constant 0 : i32
    %c0_i32_1 = arith.constant 0 : i32
    return %c0_i32, %c0_i32_0 : i32, i32
  }
  func.func @transform_7(%arg0: i32) -> (i32, i32, i32) {
    %c0_i32 = arith.constant 0 : i32
    %c0_i32_0 = arith.constant 0 : i32
    %c0_i32_1 = arith.constant 0 : i32
    return %arg0, %c0_i32, %c0_i32_0 : i32, i32, i32
  }
  func.func @transform_8(%arg0: i32) -> (i32, i32, i32) {
    %c0_i32 = arith.constant 0 : i32
    %c0_i32_0 = arith.constant 0 : i32
    %c0_i32_1 = arith.constant 0 : i32
    return %arg0, %c0_i32, %c0_i32_0 : i32, i32, i32
  }
}

</mosaic_0001>

<llo_original>
// kernel: comod_inference.1
$region0: #{comod_inference.1}
  #allocation0 [shape = 'u32[]', space=smem, size = 0x4, offset = 0x4, fixed_abs, tag = 'smem constant byte address 0x4 - core index']
  #allocation1 [shape = 'u32[144,128]{1,0:T(1,128)}', space=vmem, size = 0x12000, scoped, tag = 'internal scratch']
  %s0 = inlined_call_operand.vmem [shape: bf16[2,3,256], index: 0, kind: input, shape index: {}]
  %s1 = inlined_call_operand.vmem [shape: bf16[2,1,256], index: 1, kind: input, shape index: {}]
  %s2 = inlined_call_operand.vmem [shape: f32[2,32,1], index: 2, kind: input, shape index: {}]
  %s3 = inlined_call_operand.vmem [shape: f32[32,5], index: 3, kind: input, shape index: {}]
  %s4 = inlined_call_operand.vmem [shape: f32[32,32], index: 4, kind: input, shape index: {}]
  %s5 = inlined_call_operand.vmem [shape: f32[32,3], index: 5, kind: input, shape index: {}]
  %s6 = inlined_call_operand.vmem [shape: f32[3,1], index: 6, kind: input, shape index: {}]
  %s7 = inlined_call_operand.vmem [shape: bf16[2,3,256], index: 7, kind: output, shape index: {0}]
  %s8 = inlined_call_operand.vmem [shape: bf16[2,3,256], index: 8, kind: output, shape index: {1}]
  %9 = xla_tuple %s7, %s8
  %s10 = sld [smem:[#allocation0]]
  $region69: #{comod_inference.1} parent=0
    _
  %s12 = ssub.s32 1, %s10
  %s13 = scalar_select 0, %s12, %s10
  loop: start=0, step=1, limit=4
  $region2: #{comod_inference.1} parent=0 // loop_pre_header
    _
  $region3: #{comod_inference.1} parent=0 // loop_header
    %s15 = sphi 0, %s19
    %p16 = scmp.ge.s32.totalorder %s15, 4
    %s25 = sphi 0, %s27
    %s28 = sphi 0, %s25
    %s29 = sphi 0, %s28
    %s45 = sphi 0, %s29
    %s51 = sphi 0, %s53
    %s54 = sphi 0, %s51
    %s55 = sphi 0, %s54
    %s71 = sphi 0, %s55
    %s77 = sphi 0, %s79
    %s80 = sphi 0, %s77
    %s81 = sphi 0, %s80
    %s97 = sphi 0, %s81
    %s101 = sphi 0, %s101
    %s103 = sphi 0, %s101
    %s104 = sphi 0, %s103
    %s118 = sphi 0, %s104
    %s122 = sphi 0, %s122
    %s124 = sphi 0, %s122
    %s125 = sphi 0, %s124
    %s139 = sphi 0, %s125
    %s143 = sphi 0, %s143
    %s145 = sphi 0, %s143
    %s146 = sphi 0, %s145
    %s160 = sphi 0, %s146
    %s164 = sphi 0, %s164
    %s166 = sphi 0, %s164
    %s167 = sphi 0, %s166
    %s181 = sphi 0, %s167
    %s187 = sphi 0, %s189
    %s190 = sphi 0, %s187
    %s191 = sphi 0, %s190
    %s207 = sphi 0, %s191
    %s213 = sphi 0, %s215
    %s216 = sphi 0, %s213
    %s217 = sphi 0, %s216
    %s233 = sphi 0, %s217
  $region4: #{comod_inference.1} parent=0 // loop_header_branch
    %18 = sbr.rel (%p16) target = $region8
  $region5: #{comod_inference.1} parent=0 // loop_body
    %s20 = ssub.s32 %s15, 1
    %s21 = ssub.s32 %s15, 2
    %s22 = sadd.s32 %s15, 1
    %s23 = ssub.s32 %s15, %s22
    %p24 = scmp.eq.s32.totalorder %s23, 0
    %s26 = sadd.s32 %s25, 1
    %s27 = scalar_select %p24, %s25, %s26
    %p30 = pneg %p24
    %p31 = scmp.eq.s32.totalorder %s15, 1
    %p32 = por %p30, %p31
    %p33 = scmp.ne.s32.totalorder %s25, %s28
    %p34 = scmp.eq.s32.totalorder %s15, 0
    %p35 = por %p33, %p34
    %p36 = scmp.ne.s32.totalorder %s25, %s28
    %p37 = scmp.eq.s32.totalorder %s20, 1
    %p38 = por %p36, %p37
    %p39 = scmp.ne.s32.totalorder %s28, %s29
    %p40 = scmp.eq.s32.totalorder %s20, 0
    %p41 = por %p39, %p40
    %p42 = scmp.ne.s32.totalorder %s28, %s29
    %p43 = scmp.eq.s32.totalorder %s21, 1
    %p44 = por %p42, %p43
    %p46 = scmp.ne.s32.totalorder %s29, %s45
    %p47 = scmp.eq.s32.totalorder %s21, 0
    %p48 = por %p46, %p47
    %s49 = ssub.s32 %s15, %s22
    %p50 = scmp.eq.s32.totalorder %s49, 0
    %s52 = sadd.s32 %s51, 1
    %s53 = scalar_select %p50, %s51, %s52
    %p56 = pneg %p50
    %p57 = scmp.eq.s32.totalorder %s15, 1
    %p58 = por %p56, %p57
    %p59 = scmp.ne.s32.totalorder %s51, %s54
    %p60 = scmp.eq.s32.totalorder %s15, 0
    %p61 = por %p59, %p60
    %p62 = scmp.ne.s32.totalorder %s51, %s54
    %p63 = scmp.eq.s32.totalorder %s20, 1
    %p64 = por %p62, %p63
    %p65 = scmp.ne.s32.totalorder %s54, %s55
    %p66 = scmp.eq.s32.totalorder %s20, 0
    %p67 = por %p65, %p66
    %p68 = scmp.ne.s32.totalorder %s54, %s55
    %p69 = scmp.eq.s32.totalorder %s21, 1
    %p70 = por %p68, %p69
    %p72 = scmp.ne.s32.totalorder %s55, %s71
    %p73 = scmp.eq.s32.totalorder %s21, 0
    %p74 = por %p72, %p73
    %s75 = ssub.s32 %s15, %s22
    %p76 = scmp.eq.s32.totalorder %s75, 0
    %s78 = sadd.s32 %s77, 1
    %s79 = scalar_select %p76, %s77, %s78
    %p82 = pneg %p76
    %p83 = scmp.eq.s32.totalorder %s15, 1
    %p84 = por %p82, %p83
    %p85 = scmp.ne.s32.totalorder %s77, %s80
    %p86 = scmp.eq.s32.totalorder %s15, 0
    %p87 = por %p85, %p86
    %p88 = scmp.ne.s32.totalorder %s77, %s80
    %p89 = scmp.eq.s32.totalorder %s20, 1
    %p90 = por %p88, %p89
    %p91 = scmp.ne.s32.totalorder %s80, %s81
    %p92 = scmp.eq.s32.totalorder %s20, 0
    %p93 = por %p91, %p92
    %p94 = scmp.ne.s32.totalorder %s80, %s81
    %p95 = scmp.eq.s32.totalorder %s21, 1
    %p96 = por %p94, %p95
    %p98 = scmp.ne.s32.totalorder %s81, %s97
    %p99 = scmp.eq.s32.totalorder %s21, 0
    %p100 = por %p98, %p99
    %s102 = sadd.s32 %s101, 1
    %p105 = scmp.eq.s32.totalorder %s15, 1
    %p106 = scmp.ne.s32.totalorder %s101, %s103
    %p107 = scmp.eq.s32.totalorder %s15, 0
    %p108 = por %p106, %p107
    %p109 = scmp.ne.s32.totalorder %s101, %s103
    %p110 = scmp.eq.s32.totalorder %s20, 1
    %p111 = por %p109, %p110
    %p112 = scmp.ne.s32.totalorder %s103, %s104
    %p113 = scmp.eq.s32.totalorder %s20, 0
    %p114 = por %p112, %p113
    %p115 = scmp.ne.s32.totalorder %s103, %s104
    %p116 = scmp.eq.s32.totalorder %s21, 1
    %p117 = por %p115, %p116
    %p119 = scmp.ne.s32.totalorder %s104, %s118
    %p120 = scmp.eq.s32.totalorder %s21, 0
    %p121 = por %p119, %p120
    %s123 = sadd.s32 %s122, 1
    %p126 = scmp.eq.s32.totalorder %s15, 1
    %p127 = scmp.ne.s32.totalorder %s122, %s124
    %p128 = scmp.eq.s32.totalorder %s15, 0
    %p129 = por %p127, %p128
    %p130 = scmp.ne.s32.totalorder %s122, %s124
    %p131 = scmp.eq.s32.totalorder %s20, 1
    %p132 = por %p130, %p131
    %p133 = scmp.ne.s32.totalorder %s124, %s125
    %p134 = scmp.eq.s32.totalorder %s20, 0
    %p135 = por %p133, %p134
    %p136 = scmp.ne.s32.totalorder %s124, %s125
    %p137 = scmp.eq.s32.totalorder %s21, 1
    %p138 = por %p136, %p137
    %p140 = scmp.ne.s32.totalorder %s125, %s139
    %p141 = scmp.eq.s32.totalorder %s21, 0
    %p142 = por %p140, %p141
    %s144 = sadd.s32 %s143, 1
    %p147 = scmp.eq.s32.totalorder %s15, 1
    %p148 = scmp.ne.s32.totalorder %s143, %s145
    %p149 = scmp.eq.s32.totalorder %s15, 0
    %p150 = por %p148, %p149
    %p151 = scmp.ne.s32.totalorder %s143, %s145
    %p152 = scmp.eq.s32.totalorder %s20, 1
    %p153 = por %p151, %p152
    %p154 = scmp.ne.s32.totalorder %s145, %s146
    %p155 = scmp.eq.s32.totalorder %s20, 0
    %p156 = por %p154, %p155
    %p157 = scmp.ne.s32.totalorder %s145, %s146
    %p158 = scmp.eq.s32.totalorder %s21, 1
    %p159 = por %p157, %p158
    %p161 = scmp.ne.s32.totalorder %s146, %s160
    %p162 = scmp.eq.s32.totalorder %s21, 0
    %p163 = por %p161, %p162
    %s165 = sadd.s32 %s164, 1
    %p168 = scmp.eq.s32.totalorder %s15, 1
    %p169 = scmp.ne.s32.totalorder %s164, %s166
    %p170 = scmp.eq.s32.totalorder %s15, 0
    %p171 = por %p169, %p170
    %p172 = scmp.ne.s32.totalorder %s164, %s166
    %p173 = scmp.eq.s32.totalorder %s20, 1
    %p174 = por %p172, %p173
    %p175 = scmp.ne.s32.totalorder %s166, %s167
    %p176 = scmp.eq.s32.totalorder %s20, 0
    %p177 = por %p175, %p176
    %p178 = scmp.ne.s32.totalorder %s166, %s167
    %p179 = scmp.eq.s32.totalorder %s21, 1
    %p180 = por %p178, %p179
    %p182 = scmp.ne.s32.totalorder %s167, %s181
    %p183 = scmp.eq.s32.totalorder %s21, 0
    %p184 = por %p182, %p183
    %s185 = ssub.s32 %s15, %s22
    %p186 = scmp.eq.s32.totalorder %s185, 0
    %s188 = sadd.s32 %s187, 1
    %s189 = scalar_select %p186, %s187, %s188
    %p192 = pneg %p186
    %p193 = scmp.eq.s32.totalorder %s15, 1
    %p194 = por %p192, %p193
    %p195 = scmp.ne.s32.totalorder %s187, %s190
    %p196 = scmp.eq.s32.totalorder %s15, 0
    %p197 = por %p195, %p196
    %p198 = scmp.ne.s32.totalorder %s187, %s190
    %p199 = scmp.eq.s32.totalorder %s20, 1
    %p200 = por %p198, %p199
    %p201 = scmp.ne.s32.totalorder %s190, %s191
    %p202 = scmp.eq.s32.totalorder %s20, 0
    %p203 = por %p201, %p202
    %p204 = scmp.ne.s32.totalorder %s190, %s191
    %p205 = scmp.eq.s32.totalorder %s21, 1
    %p206 = por %p204, %p205
    %p208 = scmp.ne.s32.totalorder %s191, %s207
    %p209 = scmp.eq.s32.totalorder %s21, 0
    %p210 = por %p208, %p209
    %s211 = ssub.s32 %s15, %s22
    %p212 = scmp.eq.s32.totalorder %s211, 0
    %s214 = sadd.s32 %s213, 1
    %s215 = scalar_select %p212, %s213, %s214
    %p218 = pneg %p212
    %p219 = scmp.eq.s32.totalorder %s15, 1
    %p220 = por %p218, %p219
    %p221 = scmp.ne.s32.totalorder %s213, %s216
    %p222 = scmp.eq.s32.totalorder %s15, 0
    %p223 = por %p221, %p222
    %p224 = scmp.ne.s32.totalorder %s213, %s216
    %p225 = scmp.eq.s32.totalorder %s20, 1
    %p226 = por %p224, %p225
    %p227 = scmp.ne.s32.totalorder %s216, %s217
    %p228 = scmp.eq.s32.totalorder %s20, 0
    %p229 = por %p227, %p228
    %p230 = scmp.ne.s32.totalorder %s216, %s217
    %p231 = scmp.eq.s32.totalorder %s21, 1
    %p232 = por %p230, %p231
    %p234 = scmp.ne.s32.totalorder %s217, %s233
    %p235 = scmp.eq.s32.totalorder %s21, 0
    %p236 = por %p234, %p235
    %p237 = scmp.le.s32.totalorder 1, %s15
    %p238 = scmp.lt.s32.totalorder %s15, 3
    %p239 = pnand %p237, %p238
    %p240 = pneg %p239
    // Predicated region
    $region9: #{comod_inference.1} parent=5 // pred_check
      _
    $region10: #{comod_inference.1} parent=5 // pred_check_branch
      %242 = sbr.rel (%p239) target = $region12
    $region11: #{comod_inference.1} parent=5 // pred_region
      %s243 = ssub.s32 %s15, 1
      // Predicated region
      $region13: #{comod_inference.1} parent=11 // pred_check
        %p244 = pneg %p114
      $region14: #{comod_inference.1} parent=11 // pred_check_branch
        %246 = sbr.rel (%p244) target = $region16
      $region15: #{comod_inference.1} parent=11 // pred_region
        _
      $region16: #{comod_inference.1} parent=11 // pred_fallthru
        _
      // Predicated region
      $region17: #{comod_inference.1} parent=11 // pred_check
        %p247 = pneg %p135
      $region18: #{comod_inference.1} parent=11 // pred_check_branch
        %249 = sbr.rel (%p247) target = $region20
      $region19: #{comod_inference.1} parent=11 // pred_region
        _
      $region20: #{comod_inference.1} parent=11 // pred_fallthru
        _
      // Predicated region
      $region21: #{comod_inference.1} parent=11 // pred_check
        %p250 = pneg %p156
      $region22: #{comod_inference.1} parent=11 // pred_check_branch
        %252 = sbr.rel (%p250) target = $region24
      $region23: #{comod_inference.1} parent=11 // pred_region
        _
      $region24: #{comod_inference.1} parent=11 // pred_fallthru
        _
      // Predicated region
      $region25: #{comod_inference.1} parent=11 // pred_check
        %p253 = pneg %p177
      $region26: #{comod_inference.1} parent=11 // pred_check_branch
        %255 = sbr.rel (%p253) target = $region28
      $region27: #{comod_inference.1} parent=11 // pred_region
        _
      $region28: #{comod_inference.1} parent=11 // pred_fallthru
        _
    $region12: #{comod_inference.1} parent=5 // pred_fallthru
      _
    %p256 = scmp.lt.s32.totalorder %s15, 2
    // Predicated region
    $region29: #{comod_inference.1} parent=5 // pred_check
      %p257 = pneg %p256
    $region30: #{comod_inference.1} parent=5 // pred_check_branch
      %259 = sbr.rel (%p257) target = $region32
    $region31: #{comod_inference.1} parent=5 // pred_region
      // Predicated region
      $region33: #{comod_inference.1} parent=31 // pred_check
        %p260 = pneg %p35
      $region34: #{comod_inference.1} parent=31 // pred_check_branch
        %262 = sbr.rel (%p260) target = $region36
      $region35: #{comod_inference.1} parent=31 // pred_region
        %p263 = scmp.lt.s32.totalorder %s15, 1
        %s264 = scalar_select %p263, %s15, 1
        %s265 = smul.addr %s264, 2
        %s266 = smul.addr %s265, 2
        %s267 = scalar_lea.vmem %s0, %s266
      $region36: #{comod_inference.1} parent=31 // pred_fallthru
        _
      // Predicated region
      $region37: #{comod_inference.1} parent=31 // pred_check
        %p268 = pneg %p61
      $region38: #{comod_inference.1} parent=31 // pred_check_branch
        %270 = sbr.rel (%p268) target = $region40
      $region39: #{comod_inference.1} parent=31 // pred_region
        %p271 = scmp.lt.s32.totalorder %s15, 1
        %s272 = scalar_select %p271, %s15, 1
        %s273 = smul.addr %s272, 2
        %s274 = scalar_lea.vmem %s1, %s273
      $region40: #{comod_inference.1} parent=31 // pred_fallthru
        _
      // Predicated region
      $region41: #{comod_inference.1} parent=31 // pred_check
        %p275 = pneg %p87
      $region42: #{comod_inference.1} parent=31 // pred_check_branch
        %277 = sbr.rel (%p275) target = $region44
      $region43: #{comod_inference.1} parent=31 // pred_region
        %p278 = scmp.lt.s32.totalorder %s15, 1
        %s279 = scalar_select %p278, %s15, 1
        %s280 = smul.addr %s279, 4
        %s281 = smul.addr %s280, 8
        %s282 = scalar_lea.vmem %s2, %s281
      $region44: #{comod_inference.1} parent=31 // pred_fallthru
        _
    $region32: #{comod_inference.1} parent=5 // pred_fallthru
      _
    %p283 = scmp.le.s32.totalorder 1, %s15
    %p284 = scmp.lt.s32.totalorder %s15, 3
    %p285 = pnand %p283, %p284
    %p286 = pneg %p285
    // Predicated region
    $region45: #{comod_inference.1} parent=5 // pred_check
      _
    $region46: #{comod_inference.1} parent=5 // pred_check_branch
      %288 = sbr.rel (%p285) target = $region48
    $region47: #{comod_inference.1} parent=5 // pred_region
      %s289 = ssub.s32 %s15, 1
      %p290 = scmp.lt.s32.totalorder %s20, 1
      %s291 = scalar_select %p290, %s20, 1
      %s292 = smul.addr %s291, 2
      %s293 = smul.addr %s292, 2
      %s294 = scalar_lea.vmem %s0, %s293
      %p295 = pneg %p41
      %p296 = pneg %p38
      %p297 = scmp.lt.s32.totalorder %s20, 1
      %s298 = scalar_select %p297, %s20, 1
      %s299 = smul.addr %s298, 2
      %s300 = scalar_lea.vmem %s1, %s299
      %p301 = pneg %p67
      %p302 = pneg %p64
      %p303 = scmp.lt.s32.totalorder %s20, 1
      %s304 = scalar_select %p303, %s20, 1
      %s305 = smul.addr %s304, 4
      %s306 = smul.addr %s305, 8
      %s307 = scalar_lea.vmem %s2, %s306
      %p308 = pneg %p93
      %p309 = pneg %p90
      %p310 = pneg %p114
      %p311 = pneg %p111
      %p312 = pneg %p135
      %p313 = pneg %p132
      %p314 = pneg %p156
      %p315 = pneg %p153
      %p316 = pneg %p177
      %p317 = pneg %p174
      %p318 = pneg %p203
      %p319 = pneg %p200
      %p320 = scmp.lt.s32.totalorder %s20, 1
      %s321 = scalar_select %p320, %s20, 1
      %s322 = smul.addr %s321, 2
      %s323 = smul.addr %s322, 2
      %s324 = scalar_lea.vmem %s7, %s323
      %p325 = pneg %p229
      %p326 = pneg %p226
      %p327 = scmp.lt.s32.totalorder %s20, 1
      %s328 = scalar_select %p327, %s20, 1
      %s329 = smul.addr %s328, 2
      %s330 = smul.addr %s329, 2
      %s331 = scalar_lea.vmem %s8, %s330
      %p332 = scmp.lt.s32.totalorder %s20, 1
      %s333 = scalar_select %p332, %s20, 1
      %s334 = smul.addr %s333, 2
      %s335 = smul.addr %s334, 2
      %s336 = scalar_lea.vmem %s0, %s335
      %p337 = scmp.lt.s32.totalorder %s20, 1
      %s338 = scalar_select %p337, %s20, 1
      %s339 = smul.addr %s338, 2
      %s340 = scalar_lea.vmem %s1, %s339
      %p341 = scmp.lt.s32.totalorder %s20, 1
      %s342 = scalar_select %p341, %s20, 1
      %s343 = smul.addr %s342, 4
      %s344 = smul.addr %s343, 8
      %s345 = scalar_lea.vmem %s2, %s344
      %p346 = scmp.lt.s32.totalorder %s20, 1
      %s347 = scalar_select %p346, %s20, 1
      %s348 = smul.addr %s347, 2
      %s349 = smul.addr %s348, 2
      %s350 = scalar_lea.vmem %s7, %s349
      %p351 = scmp.lt.s32.totalorder %s20, 1
      %s352 = scalar_select %p351, %s20, 1
      %s353 = smul.addr %s352, 2
      %s354 = smul.addr %s353, 2
      %s355 = scalar_lea.vmem %s8, %s354
      %v356 = vld [vmem:[%s3] sm:$0xff]
      %v357 = vld [vmem:[%s3 + $0x8] sm:$0xff]
      %v358 = vld [vmem:[%s3 + $0x10] sm:$0xff]
      %v359 = vld [vmem:[%s3 + $0x18] sm:$0xff]
      %v360 = vld [vmem:[%s4] sm:$0xff]
      %v361 = vld [vmem:[%s4 + $0x8] sm:$0xff]
      %v362 = vld [vmem:[%s4 + $0x10] sm:$0xff]
      %v363 = vld [vmem:[%s4 + $0x18] sm:$0xff]
      %v364 = vld [vmem:[%s5] sm:$0xff]
      %v365 = vld [vmem:[%s5 + $0x8] sm:$0xff]
      %v366 = vld [vmem:[%s5 + $0x10] sm:$0xff]
      %v367 = vld [vmem:[%s5 + $0x18] sm:$0xff]
      %v368 = vld [vmem:[%s6] sm:$0x7]
      %v369 = vld [vmem:[%s336] sm:$0xf]
      %v370 = vunpack.c.l.bf16 %v369
      %v371 = vld [vmem:[%s340] sm:$0x3]
      %v372 = vunpack.c.l.bf16 %v371
      %v373 = vsub.f32 1.0, %v372
      %v375 = vlaneseq
      %v376 = vshrl.u32 %v375, 7
      %v377 = vsub.s32 0, %v376
      %v378 = vrot.slane %v373, %v377
      %v379 = vlaneseq
      %v380 = vshrl.u32 %v379, 7
      %v381 = vsub.s32 2, %v380
      %v382 = vrot.slane %v373, %v381
      %v385 = vlaneseq
      %v386 = vshrl.u32 %v385, 7
      %v387 = vsub.s32 0, %v386
      %v388 = vrot.slane %v378, %v387
      %v389 = vlaneseq
      %v390 = vshrl.u32 %v389, 7
      %v391 = vsub.s32 0, %v390
      %v392 = vrot.slane %v382, %v391
      %v395 = vcombine.low %v388, %v392
      %v397 = vmul.f32 %v370, %v395
      %v399 = vcombine.high %v397, %v397
      %v401 = vpack.c.bf16 %v397, %v397
      %v402 = vpack.c.bf16 %v399, %v399
      %v405 = vcombine.low %v401, %v402
      %v407 = vunpack.c.l.s4 1983009808
      %v408 = vunpack.c.0.s8 %v407
      %v409 = vlaneseq
      %v410 = vshrl.u32 %v409, 7
      %v411 = vsub.s32 %v408, %v410
      %v412 = vrot.slane %v405, %v411
      %vm414 = vcmask 1041408
      %vm415 = vsmask.f32 1280
      %vm416 = vmand %vm414, %vm415
      %vm417 = vcmask 1043458
      %vm418 = vsmask.f32 3328
      %vm419 = vmand %vm417, %vm418
      %vm420 = vmor %vm419, %vm416
      %v421 = vld [vmem:[%s355] sm:$0xf]
      %v422 = vsel %vm420, %v412, %v421
      %423 = vst [vmem:[%s355] sm:$0xf] %v422
      %425 = vset.pattern.permute.xlu0 3
      %426 = vperm.xlu0 %425, %v356
      %v427 = vpop.permute.xlu0 %426
      %430 = vset.pattern.permute.xlu0 3
      %431 = vperm.xlu0 %430, %v357
      %v432 = vpop.permute.xlu0 %431
      %435 = vset.pattern.permute.xlu0 3
      %436 = vperm.xlu0 %435, %v358
      %v437 = vpop.permute.xlu0 %436
      %440 = vset.pattern.permute.xlu0 3
      %441 = vperm.xlu0 %440, %v359
      %v442 = vpop.permute.xlu0 %441
      %v445 = vlaneseq
      %v446 = vshrl.u32 %v445, 7
      %v447 = vsub.s32 0, %v446
      %v448 = vrot.slane %v372, %v447
      %v449 = vlaneseq
      %v450 = vshrl.u32 %v449, 7
      %v451 = vsub.s32 2, %v450
      %v452 = vrot.slane %v372, %v451
      %v455 = vlaneseq
      %v456 = vshrl.u32 %v455, 7
      %v457 = vsub.s32 0, %v456
      %v458 = vrot.slane %v448, %v457
      %v459 = vlaneseq
      %v460 = vshrl.u32 %v459, 7
      %v461 = vsub.s32 0, %v460
      %v462 = vrot.slane %v452, %v461
      %v463 = vmul.f32 %v427, %v458
      %v464 = vmul.f32 %v427, %v462
      %v465 = vmul.f32 %v432, %v458
      %v466 = vmul.f32 %v432, %v462
      %v467 = vmul.f32 %v437, %v458
      %v468 = vmul.f32 %v437, %v462
      %v469 = vmul.f32 %v442, %v458
      %v470 = vmul.f32 %v442, %v462
      %vm471 = vcmask 23552
      %v472 = vsel %vm471, %v356, 0
      %v474 = vsel %vm471, %v357, 0
      %v476 = vsel %vm471, %v358, 0
      %v478 = vsel %vm471, %v359, 0
      %vm480 = vcmask 1042432
      %v481 = vsel %vm480, %v397, 0
      %v483 = vsel %vm480, %v399, 0
      %485 = vmatprep.subr.mxu0 %v483
      %486 = vmatpush1.msra.mxu0 %v481
      %487 = vmatprep.subr.mxu0 0.0
      %488 = vmatpush1.msra.mxu0 0.0
      %489 = vmatprep.subr.mxu0 0.0
      %490 = vmatpush1.msra.mxu0 0.0
      %491 = vmatprep.subr.mxu0 0.0
      %492 = vmatpush1.msra.mxu0 0.0
      %493 = vmatprep.subr.mxu0 0.0
      %494 = vmatpush1.msra.mxu0 0.0
      %495 = vmatprep.subr.mxu0 0.0
      %496 = vmatpush1.msra.mxu0 0.0
      %497 = vmatprep.subr.mxu0 0.0
      %498 = vmatpush1.msra.mxu0 0.0
      %499 = vmatprep.subr.mxu0 0.0
      %500 = vmatpush1.msra.mxu0 0.0
      %501 = vmatprep.subr.mxu0 0.0
      %502 = vmatpush1.msra.mxu0 0.0
      %503 = vmatprep.subr.mxu0 0.0
      %504 = vmatpush1.msra.mxu0 0.0
      %505 = vmatprep.subr.mxu0 0.0
      %506 = vmatpush1.msra.mxu0 0.0
      %507 = vmatprep.subr.mxu0 0.0
      %508 = vmatpush1.msra.mxu0 0.0
      %509 = vmatprep.subr.mxu0 0.0
      %510 = vmatpush1.msra.mxu0 0.0
      %511 = vmatprep.subr.mxu0 0.0
      %512 = vmatpush1.msra.mxu0 0.0
      %513 = vmatprep.subr.mxu0 0.0
      %514 = vmatpush1.msra.mxu0 0.0
      %515 = vmatprep.subr.mxu0 0.0
      %516 = vmatpush1.msra.mxu0 0.0
      %517 = vmatprep.subr.mxu0 0.0
      %518 = vmatpush1.msra.mxu0 0.0
      %519 = vmatprep.subr.mxu0 0.0
      %520 = vmatpush1.msra.mxu0 0.0
      %521 = vmatprep.subr.mxu0 0.0
      %522 = vmatpush1.msra.mxu0 0.0
      %523 = vmatprep.subr.mxu0 0.0
      %524 = vmatpush1.msra.mxu0 0.0
      %525 = vmatprep.subr.mxu0 0.0
      %526 = vmatpush1.msra.mxu0 0.0
      %527 = vmatprep.subr.mxu0 0.0
      %528 = vmatpush1.msra.mxu0 0.0
      %529 = vmatprep.subr.mxu0 0.0
      %530 = vmatpush1.msra.mxu0 0.0
      %531 = vmatprep.subr.mxu0 0.0
      %532 = vmatpush1.msra.mxu0 0.0
      %533 = vmatprep.subr.mxu0 0.0
      %534 = vmatpush1.msra.mxu0 0.0
      %535 = vmatprep.subr.mxu0 0.0
      %536 = vmatpush1.msra.mxu0 0.0
      %537 = vmatprep.subr.mxu0 0.0
      %538 = vmatpush1.msra.mxu0 0.0
      %539 = vmatprep.subr.mxu0 0.0
      %540 = vmatpush1.msra.mxu0 0.0
      %541 = vmatprep.subr.mxu0 0.0
      %542 = vmatpush1.msra.mxu0 0.0
      %543 = vmatprep.subr.mxu0 0.0
      %544 = vmatpush1.msra.mxu0 0.0
      %545 = vmatprep.subr.mxu0 0.0
      %546 = vmatpush1.msra.mxu0 0.0
      %547 = vmatprep.subr.mxu0 0.0
      %548 = vmatpush1.msra.mxu0 0.0
      %549 = vmatprep.mubr.f32.mxu0 0.0
      %550 = vmatmul.mubr.f32.gmra.mrb[0].mxu0 %v472
      %v551 = vpop.f32.mrb[0].mxu0
      %v552 = vadd.f32 %v463, %v551
      %v553 = vpop.f32.mrb[0].mxu0
      %v554 = vadd.f32 %v464, %v553
      %555 = vmatprep.mubr.f32.mxu0 0.0
      %556 = vmatmul.mubr.f32.gmra.mrb[0].mxu0 %v474
      %v557 = vpop.f32.mrb[0].mxu0
      %v558 = vadd.f32 %v465, %v557
      %v559 = vpop.f32.mrb[0].mxu0
      %v560 = vadd.f32 %v466, %v559
      %561 = vmatprep.mubr.f32.mxu0 0.0
      %562 = vmatmul.mubr.f32.gmra.mrb[0].mxu0 %v476
      %v563 = vpop.f32.mrb[0].mxu0
      %v564 = vadd.f32 %v467, %v563
      %v565 = vpop.f32.mrb[0].mxu0
      %v566 = vadd.f32 %v468, %v565
      %567 = vmatprep.mubr.f32.mxu0 0.0
      %568 = vmatmul.mubr.f32.gmra.mrb[0].mxu0 %v478
      %v569 = vpop.f32.mrb[0].mxu0
      %v570 = vadd.f32 %v469, %v569
      %v571 = vpop.f32.mrb[0].mxu0
      %v572 = vadd.f32 %v470, %v571
      %573 = vdwg.mxu0
      %574 = vset.pattern.permute.xlu0 4
      %575 = vperm.xlu0 %574, %v356
      %v576 = vpop.permute.xlu0 %575
      %578 = vset.pattern.permute.xlu0 4
      %579 = vperm.xlu0 %578, %v357
      %v580 = vpop.permute.xlu0 %579
      %582 = vset.pattern.permute.xlu0 4
      %583 = vperm.xlu0 %582, %v358
      %v584 = vpop.permute.xlu0 %583
      %586 = vset.pattern.permute.xlu0 4
      %587 = vperm.xlu0 %586, %v359
      %v588 = vpop.permute.xlu0 %587
      %v590 = vadd.f32 %v552, %v576
      %v591 = vadd.f32 %v554, %v576
      %v592 = vadd.f32 %v558, %v580
      %v593 = vadd.f32 %v560, %v580
      %v594 = vadd.f32 %v564, %v584
      %v595 = vadd.f32 %v566, %v584
      %v596 = vadd.f32 %v570, %v588
      %v597 = vadd.f32 %v572, %v588
      %vm598 = vcmp.gt.f32.partialorder %v590, 0.0
      %vm599 = vcmp.gt.f32.partialorder %v591, 0.0
      %vm600 = vcmp.gt.f32.partialorder %v592, 0.0
      %vm601 = vcmp.gt.f32.partialorder %v593, 0.0
      %vm602 = vcmp.gt.f32.partialorder %v594, 0.0
      %vm603 = vcmp.gt.f32.partialorder %v595, 0.0
      %vm604 = vcmp.gt.f32.partialorder %v596, 0.0
      %vm605 = vcmp.gt.f32.partialorder %v597, 0.0
      %v606 = vmul.f32 %v590, 0.2
      %v607 = vmul.f32 %v591, 0.2
      %v608 = vmul.f32 %v592, 0.2
      %v609 = vmul.f32 %v593, 0.2
      %v610 = vmul.f32 %v594, 0.2
      %v611 = vmul.f32 %v595, 0.2
      %v612 = vmul.f32 %v596, 0.2
      %v613 = vmul.f32 %v597, 0.2
      %v614 = vsel %vm598, %v590, %v606
      %v615 = vsel %vm599, %v591, %v607
      %v616 = vsel %vm600, %v592, %v608
      %v617 = vsel %vm601, %v593, %v609
      %v618 = vsel %vm602, %v594, %v610
      %v619 = vsel %vm603, %v595, %v611
      %v620 = vsel %vm604, %v596, %v612
      %v621 = vsel %vm605, %v597, %v613
      %v622 = vadd.f32 %v614, %v615
      %623 = vadd.xlane.f32.xlu0 %v622
      %v624 = vpop.xlane.xlu0 %623
      %v625 = vadd.f32 %v616, %v617
      %626 = vadd.xlane.f32.xlu0 %v625
      %v627 = vpop.xlane.xlu0 %626
      %v628 = vadd.f32 %v618, %v619
      %629 = vadd.xlane.f32.xlu0 %v628
      %v630 = vpop.xlane.xlu0 %629
      %v631 = vadd.f32 %v620, %v621
      %632 = vadd.xlane.f32.xlu0 %v631
      %v633 = vpop.xlane.xlu0 %632
      %v634 = vrcp.pop 256.0
      %v635 = vmul.f32 %v624, %v634
      %v636 = vmul.f32 %v627, %v634
      %v637 = vmul.f32 %v630, %v634
      %v638 = vmul.f32 %v633, %v634
      %v639 = vld [vmem:[%s345] sm:$0xff]
      %v640 = vld [vmem:[%s345 + $0x8] sm:$0xff]
      %v641 = vld [vmem:[%s345 + $0x10] sm:$0xff]
      %v642 = vld [vmem:[%s345 + $0x18] sm:$0xff]
      %vm643 = vcmask 261120
      %v645 = vsel %vm643, %v360, 0
      %v648 = vsel %vm643, %v361, 0
      %v651 = vsel %vm643, %v362, 0
      %v654 = vsel %vm643, %v363, 0
      %656 = vmatprep.subr.mxu0 0.0
      %657 = vmatpush1.msra.mxu0 %v635
      %658 = vmatprep.subr.mxu0 0.0
      %659 = vmatpush1.msra.mxu0 %v636
      %660 = vmatprep.subr.mxu0 0.0
      %661 = vmatpush1.msra.mxu0 %v637
      %662 = vmatprep.subr.mxu0 0.0
      %663 = vmatpush1.msra.mxu0 %v638
      %664 = vmatprep.subr.mxu0 0.0
      %665 = vmatpush1.msra.mxu0 0.0
      %666 = vmatprep.subr.mxu0 0.0
      %667 = vmatpush1.msra.mxu0 0.0
      %668 = vmatprep.subr.mxu0 0.0
      %669 = vmatpush1.msra.mxu0 0.0
      %670 = vmatprep.subr.mxu0 0.0
      %671 = vmatpush1.msra.mxu0 0.0
      %672 = vmatprep.subr.mxu0 0.0
      %673 = vmatpush1.msra.mxu0 0.0
      %674 = vmatprep.subr.mxu0 0.0
      %675 = vmatpush1.msra.mxu0 0.0
      %676 = vmatprep.subr.mxu0 0.0
      %677 = vmatpush1.msra.mxu0 0.0
      %678 = vmatprep.subr.mxu0 0.0
      %679 = vmatpush1.msra.mxu0 0.0
      %680 = vmatprep.subr.mxu0 0.0
      %681 = vmatpush1.msra.mxu0 0.0
      %682 = vmatprep.subr.mxu0 0.0
      %683 = vmatpush1.msra.mxu0 0.0
      %684 = vmatprep.subr.mxu0 0.0
      %685 = vmatpush1.msra.mxu0 0.0
      %686 = vmatprep.subr.mxu0 0.0
      %687 = vmatpush1.msra.mxu0 0.0
      %688 = vmatprep.subr.mxu0 0.0
      %689 = vmatpush1.msra.mxu0 0.0
      %690 = vmatprep.subr.mxu0 0.0
      %691 = vmatpush1.msra.mxu0 0.0
      %692 = vmatprep.subr.mxu0 0.0
      %693 = vmatpush1.msra.mxu0 0.0
      %694 = vmatprep.subr.mxu0 0.0
      %695 = vmatpush1.msra.mxu0 0.0
      %696 = vmatprep.subr.mxu0 0.0
      %697 = vmatpush1.msra.mxu0 0.0
      %698 = vmatprep.subr.mxu0 0.0
      %699 = vmatpush1.msra.mxu0 0.0
      %700 = vmatprep.subr.mxu0 0.0
      %701 = vmatpush1.msra.mxu0 0.0
      %702 = vmatprep.subr.mxu0 0.0
      %703 = vmatpush1.msra.mxu0 0.0
      %704 = vmatprep.subr.mxu0 0.0
      %705 = vmatpush1.msra.mxu0 0.0
      %706 = vmatprep.subr.mxu0 0.0
      %707 = vmatpush1.msra.mxu0 0.0
      %708 = vmatprep.subr.mxu0 0.0
      %709 = vmatpush1.msra.mxu0 0.0
      %710 = vmatprep.subr.mxu0 0.0
      %711 = vmatpush1.msra.mxu0 0.0
      %712 = vmatprep.subr.mxu0 0.0
      %713 = vmatpush1.msra.mxu0 0.0
      %714 = vmatprep.subr.mxu0 0.0
      %715 = vmatpush1.msra.mxu0 0.0
      %716 = vmatprep.subr.mxu0 0.0
      %717 = vmatpush1.msra.mxu0 0.0
      %718 = vmatprep.subr.mxu0 0.0
      %719 = vmatpush1.msra.mxu0 0.0
      %720 = vmatprep.mubr.f32.mxu0 0.0
      %721 = vmatmul.mubr.f32.gmra.mrb[0].mxu0 %v645
      %v722 = vpop.f32.mrb[0].mxu0
      %v723 = vadd.f32 0.0, %v722
      %v724 = vpop.f32.mrb[0].mxu0
      %725 = vmatprep.mubr.f32.mxu0 0.0
      %726 = vmatmul.mubr.f32.gmra.mrb[0].mxu0 %v648
      %v727 = vpop.f32.mrb[0].mxu0
      %v728 = vadd.f32 0.0, %v727
      %v729 = vpop.f32.mrb[0].mxu0
      %730 = vmatprep.mubr.f32.mxu0 0.0
      %731 = vmatmul.mubr.f32.gmra.mrb[0].mxu0 %v651
      %v732 = vpop.f32.mrb[0].mxu0
      %v733 = vadd.f32 0.0, %v732
      %v734 = vpop.f32.mrb[0].mxu0
      %735 = vmatprep.mubr.f32.mxu0 0.0
      %736 = vmatmul.mubr.f32.gmra.mrb[0].mxu0 %v654
      %v737 = vpop.f32.mrb[0].mxu0
      %v738 = vadd.f32 0.0, %v737
      %v739 = vpop.f32.mrb[0].mxu0
      %740 = vdwg.mxu0
      %v741 = vadd.f32 %v639, %v723
      %v742 = vadd.f32 %v640, %v728
      %v743 = vadd.f32 %v641, %v733
      %v744 = vadd.f32 %v642, %v738
      %746 = vset.pattern.permute.xlu0 0
      %747 = vperm.xlu0 %746, %v741
      %v748 = vpop.permute.xlu0 %747
      %751 = vset.pattern.permute.xlu0 0
      %752 = vperm.xlu0 %751, %v742
      %v753 = vpop.permute.xlu0 %752
      %756 = vset.pattern.permute.xlu0 0
      %757 = vperm.xlu0 %756, %v743
      %v758 = vpop.permute.xlu0 %757
      %761 = vset.pattern.permute.xlu0 0
      %762 = vperm.xlu0 %761, %v744
      %v763 = vpop.permute.xlu0 %762
      %v765 = vmul.f32 %v364, %v748
      %v766 = vmul.f32 %v365, %v753
      %v767 = vmul.f32 %v366, %v758
      %v768 = vmul.f32 %v367, %v763
      %770 = vset.pattern.permute.xlu0 0
      %771 = vperm.xlu0 %770, %v368
      %v772 = vpop.permute.xlu0 %771
      %774 = vxpose.xlu0.b32.start [1/16] %v765, 128
      %775 = vxpose.xlu0.b32.cont [2/16] %v766, 128
      %776 = vxpose.xlu0.b32.cont [3/16] %v767, 128
      %777 = vxpose.xlu0.b32.cont [4/16] %v768, 128
      %778 = vxpose.xlu0.b32.cont [5/16] 0.0, 128
      %779 = vxpose.xlu0.b32.cont [6/16] 0.0, 128
      %780 = vxpose.xlu0.b32.cont [7/16] 0.0, 128
      %781 = vxpose.xlu0.b32.cont [8/16] 0.0, 128
      %782 = vxpose.xlu0.b32.cont [9/16] 0.0, 128
      %783 = vxpose.xlu0.b32.cont [10/16] 0.0, 128
      %784 = vxpose.xlu0.b32.cont [11/16] 0.0, 128
      %785 = vxpose.xlu0.b32.cont [12/16] 0.0, 128
      %786 = vxpose.xlu0.b32.cont [13/16] 0.0, 128
      %787 = vxpose.xlu0.b32.cont [14/16] 0.0, 128
      %788 = vxpose.xlu0.b32.cont [15/16] 0.0, 128
      %789 = vxpose.xlu0.b32.end [16/16] 0.0, 128
      %v790 = vpop.trf.xlu0
      %v791 = vpop.trf.xlu0
      %v792 = vpop.trf.xlu0
      %v793 = vpop.trf.xlu0
      %v794 = vpop.trf.xlu0
      %v795 = vpop.trf.xlu0
      %v796 = vpop.trf.xlu0
      %v797 = vpop.trf.xlu0
      %v798 = vpop.trf.xlu0
      %v799 = vpop.trf.xlu0
      %v800 = vpop.trf.xlu0
      %v801 = vpop.trf.xlu0
      %v802 = vpop.trf.xlu0
      %v803 = vpop.trf.xlu0
      %v804 = vpop.trf.xlu0
      %v805 = vpop.trf.xlu0
      %v807 = vsel %vm643, %v790, 0
      %809 = vmatprep.subr.mxu0 %v615
      %810 = vmatpush1.msra.mxu0 %v614
      %811 = vmatprep.subr.mxu0 %v617
      %812 = vmatpush1.msra.mxu0 %v616
      %813 = vmatprep.subr.mxu0 %v619
      %814 = vmatpush1.msra.mxu0 %v618
      %815 = vmatprep.subr.mxu0 %v621
      %816 = vmatpush1.msra.mxu0 %v620
      %817 = vmatprep.subr.mxu0 0.0
      %818 = vmatpush1.msra.mxu0 0.0
      %819 = vmatprep.subr.mxu0 0.0
      %820 = vmatpush1.msra.mxu0 0.0
      %821 = vmatprep.subr.mxu0 0.0
      %822 = vmatpush1.msra.mxu0 0.0
      %823 = vmatprep.subr.mxu0 0.0
      %824 = vmatpush1.msra.mxu0 0.0
      %825 = vmatprep.subr.mxu0 0.0
      %826 = vmatpush1.msra.mxu0 0.0
      %827 = vmatprep.subr.mxu0 0.0
      %828 = vmatpush1.msra.mxu0 0.0
      %829 = vmatprep.subr.mxu0 0.0
      %830 = vmatpush1.msra.mxu0 0.0
      %831 = vmatprep.subr.mxu0 0.0
      %832 = vmatpush1.msra.mxu0 0.0
      %833 = vmatprep.subr.mxu0 0.0
      %834 = vmatpush1.msra.mxu0 0.0
      %835 = vmatprep.subr.mxu0 0.0
      %836 = vmatpush1.msra.mxu0 0.0
      %837 = vmatprep.subr.mxu0 0.0
      %838 = vmatpush1.msra.mxu0 0.0
      %839 = vmatprep.subr.mxu0 0.0
      %840 = vmatpush1.msra.mxu0 0.0
      %841 = vmatprep.subr.mxu0 0.0
      %842 = vmatpush1.msra.mxu0 0.0
      %843 = vmatprep.subr.mxu0 0.0
      %844 = vmatpush1.msra.mxu0 0.0
      %845 = vmatprep.subr.mxu0 0.0
      %846 = vmatpush1.msra.mxu0 0.0
      %847 = vmatprep.subr.mxu0 0.0
      %848 = vmatpush1.msra.mxu0 0.0
      %849 = vmatprep.subr.mxu0 0.0
      %850 = vmatpush1.msra.mxu0 0.0
      %851 = vmatprep.subr.mxu0 0.0
      %852 = vmatpush1.msra.mxu0 0.0
      %853 = vmatprep.subr.mxu0 0.0
      %854 = vmatpush1.msra.mxu0 0.0
      %855 = vmatprep.subr.mxu0 0.0
      %856 = vmatpush1.msra.mxu0 0.0
      %857 = vmatprep.subr.mxu0 0.0
      %858 = vmatpush1.msra.mxu0 0.0
      %859 = vmatprep.subr.mxu0 0.0
      %860 = vmatpush1.msra.mxu0 0.0
      %861 = vmatprep.subr.mxu0 0.0
      %862 = vmatpush1.msra.mxu0 0.0
      %863 = vmatprep.subr.mxu0 0.0
      %864 = vmatpush1.msra.mxu0 0.0
      %865 = vmatprep.subr.mxu0 0.0
      %866 = vmatpush1.msra.mxu0 0.0
      %867 = vmatprep.subr.mxu0 0.0
      %868 = vmatpush1.msra.mxu0 0.0
      %869 = vmatprep.subr.mxu0 0.0
      %870 = vmatpush1.msra.mxu0 0.0
      %871 = vmatprep.subr.mxu0 0.0
      %872 = vmatpush1.msra.mxu0 0.0
      %873 = vmatprep.mubr.f32.mxu0 0.0
      %874 = vmatmul.mubr.f32.gmra.mrb[0].mxu0 %v807
      %v875 = vpop.f32.mrb[0].mxu0
      %v876 = vadd.f32 %v772, %v875
      %v877 = vpop.f32.mrb[0].mxu0
      %v878 = vadd.f32 %v772, %v877
      %879 = vdwg.mxu0
      %v880 = vtanh.pop %v876
      %v881 = vtanh.pop %v878
      %v882 = vpack.c.bf16 %v880, %v880
      %v883 = vpack.c.bf16 %v881, %v881
      %v886 = vcombine.low %v882, %v883
      %v888 = vunpack.c.l.s4 1983009808
      %v889 = vunpack.c.0.s8 %v888
      %v890 = vlaneseq
      %v891 = vshrl.u32 %v890, 7
      %v892 = vsub.s32 %v889, %v891
      %v893 = vrot.slane %v886, %v892
      %v895 = vld [vmem:[%s350] sm:$0xf]
      %v896 = vsel %vm420, %v893, %v895
      %897 = vst [vmem:[%s350] sm:$0xf] %v896
      %p898 = scmp.lt.s32.totalorder %s20, 1
      %s899 = scalar_select %p898, %s20, 1
      %s900 = smul.addr %s899, 2
      %s901 = smul.addr %s900, 2
      %s902 = scalar_lea.vmem %s7, %s901
      %p903 = scmp.lt.s32.totalorder %s20, 1
      %s904 = scalar_select %p903, %s20, 1
      %s905 = smul.addr %s904, 2
      %s906 = smul.addr %s905, 2
      %s907 = scalar_lea.vmem %s8, %s906
      // Predicated region
      $region49: #{comod_inference.1} parent=47 // pred_check
        %p908 = pneg %p200
      $region50: #{comod_inference.1} parent=47 // pred_check_branch
        %910 = sbr.rel (%p908) target = $region52
      $region51: #{comod_inference.1} parent=47 // pred_region
        _
      $region52: #{comod_inference.1} parent=47 // pred_fallthru
        _
      // Predicated region
      $region53: #{comod_inference.1} parent=47 // pred_check
        %p911 = pneg %p226
      $region54: #{comod_inference.1} parent=47 // pred_check_branch
        %913 = sbr.rel (%p911) target = $region56
      $region55: #{comod_inference.1} parent=47 // pred_region
        _
      $region56: #{comod_inference.1} parent=47 // pred_fallthru
        _
    $region48: #{comod_inference.1} parent=5 // pred_fallthru
      _
    %p914 = scmp.le.s32.totalorder 2, %s15
    // Predicated region
    $region57: #{comod_inference.1} parent=5 // pred_check
      %p915 = pneg %p914
    $region58: #{comod_inference.1} parent=5 // pred_check_branch
      %917 = sbr.rel (%p915) target = $region60
    $region59: #{comod_inference.1} parent=5 // pred_region
      %s918 = ssub.s32 %s15, 2
      // Predicated region
      $region61: #{comod_inference.1} parent=59 // pred_check
        %p919 = pneg %p206
      $region62: #{comod_inference.1} parent=59 // pred_check_branch
        %921 = sbr.rel (%p919) target = $region64
      $region63: #{comod_inference.1} parent=59 // pred_region
        %p922 = scmp.lt.s32.totalorder %s21, 1
        %s923 = scalar_select %p922, %s21, 1
        %s924 = smul.addr %s923, 2
        %s925 = smul.addr %s924, 2
        %s926 = scalar_lea.vmem %s7, %s925
      $region64: #{comod_inference.1} parent=59 // pred_fallthru
        _
      // Predicated region
      $region65: #{comod_inference.1} parent=59 // pred_check
        %p927 = pneg %p232
      $region66: #{comod_inference.1} parent=59 // pred_check_branch
        %929 = sbr.rel (%p927) target = $region68
      $region67: #{comod_inference.1} parent=59 // pred_region
        %p930 = scmp.lt.s32.totalorder %s21, 1
        %s931 = scalar_select %p930, %s21, 1
        %s932 = smul.addr %s931, 2
        %s933 = smul.addr %s932, 2
        %s934 = scalar_lea.vmem %s8, %s933
      $region68: #{comod_inference.1} parent=59 // pred_fallthru
        _
    $region60: #{comod_inference.1} parent=5 // pred_fallthru
      _
  $region6: #{comod_inference.1} parent=0 // loop_footer
    %s19 = sadd.s32 1, %s15
  $region7: #{comod_inference.1} parent=0 // loop_footer_branch
    %14 = sbr.rel target = $region3
  $region8: #{comod_inference.1} parent=0 // loop_exit
    _

</llo_original>
